<compile_context>
chip_gen: v6e
topology: v6e:2x2x1
jax: 0.10.0
libtpu: 0.0.40
codegen_flags: <defaults>
</compile_context>

<pallas_src>
import jax
import jax.numpy as jnp
from jax.experimental import pallas as pl
from jax.experimental.pallas import tpu as pltpu


def _round_up(a: int, b: int) -> int:
    return (a + b - 1) // b * b


def _linear_kernel(x_ref, w_ref, b_ref, o_ref):
    # x_ref: [TB, D] f32 (VMEM)  -- batch-major input tile
    # w_ref: [1, D]  f32 (VMEM)  -- resident weight row (out_features == 1)
    # b_ref: [1]     f32 (SMEM)  -- scalar bias
    # o_ref: [1, TB] f32 (VMEM)  -- lane-dense output tile (batch on lanes)
    x = x_ref[...]
    w = w_ref[...]
    # out_features == 1: VPU multiply + cross-lane reduce; keep it off the MXU.
    y = jnp.sum(x * w, axis=1, keepdims=True) + b_ref[0]          # [TB, 1]
    # Relayout to [1, TB] so the store / writeback DMA is lane-dense (full
    # vector stores, contiguous 4*TB-byte writeback).  The XLU is idle in this
    # memory-bound kernel, so the transpose is effectively free.
    o_ref[...] = jnp.transpose(y).astype(o_ref.dtype)


def multiple_linear_regression(x, weight, bias):
    """x: [B, D], weight: [1, D] (PyTorch nn.Linear layout), bias: [1] -> [B, 1]."""
    B, D = x.shape
    assert weight.shape == (1, D), "kernel assumes out_features == 1 (weight [1, D])"
    assert bias.shape == (1,)

    # Batch tile: as large as an ~8 MiB double-buffered x block allows (x is
    # lane-padded to 128 inside VMEM).  8 MiB fits every generation's default
    # scoped-VMEM limit; for very wide D on v6e/v7x it can be raised together
    # with pltpu.CompilerParams(vmem_limit_bytes=...).
    d_lanes = _round_up(D, 128)
    x_budget = 8 * 1024 * 1024
    tb_fit = max(128, (x_budget // (2 * d_lanes * 4)) // 128 * 128)

    if B > tb_fit:
        tb = tb_fit                                    # many tiles, all 128-aligned
    elif B > 256:
        # Split into two tiles so ("parallel",) can shard across both v7x TCs.
        tb = _round_up(pl.cdiv(B, 2), 128)
    else:
        tb = _round_up(B, 8)                           # tiny batch: single tile

    n_tiles = pl.cdiv(B, tb)
    b_pad = n_tiles * tb                               # only the tiny OUTPUT is padded

    out = pl.pallas_call(
        _linear_kernel,
        out_shape=jax.ShapeDtypeStruct((1, b_pad), x.dtype),
        grid_spec=pltpu.PrefetchScalarGridSpec(
            num_scalar_prefetch=0,
            grid=(n_tiles,),
            in_specs=[
                # x: batch-tiled -> software-pipelined (double-buffered).  The
                # trailing partial tile (if any) is boundary-clamped by Pallas;
                # its undefined rows only reach the padded output tail.
                pl.BlockSpec((tb, D), lambda i: (i, 0)),
                # weight: constant block index -> fetched once, VMEM-resident.
                pl.BlockSpec((1, D), lambda i: (0, 0)),
                # bias: scalar parameter in SMEM (no VMEM tile / per-step DMA).
                pl.BlockSpec(memory_space=pltpu.MemorySpace.SMEM),
            ],
            out_specs=pl.BlockSpec((1, tb), lambda i: (0, i)),
        ),
        compiler_params=pltpu.CompilerParams(
            # Independent batch tiles: shard the grid across both TensorCores
            # on v7x; harmless on v5e/v6e.
            dimension_semantics=("parallel",),
        ),
        cost_estimate=pl.CostEstimate(
            flops=2 * B * D,
            bytes_accessed=4 * (B * D + D + B),
            transcendentals=0,
        ),
    )(x, weight, bias)

    # TODO(synk): for very wide feature dims (D >~ 250K f32) the (tb, D) block
    # plus the resident weight row exceed default scoped VMEM; add a trailing
    # "arbitrary" K grid axis with an f32 VMEM accumulator before such widths.
    # TODO(synk): if the caller can supply feature-major x ([D, B]), switch the
    # x spec to (D, tb) blocks and compute D full-width VPU FMAs straight into
    # the lane-dense output (removes the 128/D lane waste on the x DMA).
    return out[0, :B].reshape(B, 1)


if __name__ == "__main__":
    input_dim = 3

    key = jax.random.PRNGKey(0)
    kx, kw, kb, kx2 = jax.random.split(key, 4)

    # Deterministic parameter init (mimic nn.Linear's uniform(-1/sqrt(D), 1/sqrt(D))).
    bound = 1.0 / float(input_dim) ** 0.5
    weight = jax.random.uniform(kw, (1, input_dim), jnp.float32, -bound, bound)
    bias = jax.random.uniform(kb, (1,), jnp.float32, -bound, bound)

    # Small case matching the module's intended use.
    batch = 8
    x = jax.random.normal(kx, (batch, input_dim), jnp.float32)
    y = jax.block_until_ready(multiple_linear_regression(x, weight, bias))
    y_ref = x @ weight.T + bias
    assert y.shape == (batch, 1)
    assert jnp.allclose(y, y_ref, atol=1e-5, rtol=1e-5)

    # Non-divisible batch: exercises the two-tile + boundary-clamped-tail path
    # (no padded copy of x is made).
    batch2 = 300
    x2 = jax.random.normal(kx2, (batch2, input_dim), jnp.float32)
    y2 = jax.block_until_ready(multiple_linear_regression(x2, weight, bias))
    y2_ref = x2 @ weight.T + bias
    assert y2.shape == (batch2, 1)
    assert jnp.allclose(y2, y2_ref, atol=1e-5, rtol=1e-5)

    print("KERNEL_OK")
</pallas_src>

<mosaic_0001>
module attributes {stable_mosaic.version = 11 : i64} {
  func.func @_linear_kernel(%arg0: i32, %arg1: memref<8x3xf32, #tpu.memory_space<vmem>>, %arg2: memref<1x3xf32, #tpu.memory_space<vmem>>, %arg3: memref<1xf32, #tpu.memory_space<smem>>, %arg4: memref<1x8xf32, #tpu.memory_space<vmem>>) attributes {dimension_semantics = [#tpu.dimension_semantics<parallel>], iteration_bounds = array<i64: 1>, scalar_prefetch = 0 : i64, scratch_operands = 0 : i64, tpu.core_type = #tpu.core_type<tc>, window_params = [{transform_indices = @transform_0, window_bounds = array<i64: 8, 3>}, {pipeline_mode = #tpu.pipeline_mode<synchronous>, transform_indices = @transform_1, window_bounds = array<i64: 1, 3>}, {transform_indices = @transform_2, window_bounds = array<i64: 1>}, {transform_indices = @transform_3, window_bounds = array<i64: 1, 8>}]} {
    %c0 = arith.constant 0 : index
    %c0_0 = arith.constant 0 : index
    %0 = vector.load %arg1[%c0, %c0_0] : memref<8x3xf32, #tpu.memory_space<vmem>>, vector<8x3xf32>
    %c0_1 = arith.constant 0 : index
    %c0_2 = arith.constant 0 : index
    %1 = vector.load %arg2[%c0_1, %c0_2] : memref<1x3xf32, #tpu.memory_space<vmem>>, vector<1x3xf32>
    %2 = vector.broadcast %1 : vector<1x3xf32> to vector<8x3xf32>
    %3 = arith.mulf %0, %2 : vector<8x3xf32>
    %cst = arith.constant dense<0.000000e+00> : vector<8xf32>
    %4 = vector.multi_reduction <add>, %3, %cst [1] : vector<8x3xf32> to vector<8xf32>
    %5 = vector.shape_cast %4 : vector<8xf32> to vector<8x1xf32>
    %c0_3 = arith.constant 0 : index
    %6 = memref.load %arg3[%c0_3] : memref<1xf32, #tpu.memory_space<smem>>
    %7 = vector.broadcast %6 : f32 to vector<8x1xf32>
    %8 = arith.addf %5, %7 : vector<8x1xf32>
    %9 = tpu.transpose %8, [1, 0] : vector<8x1xf32> -> vector<1x8xf32>
    %c0_4 = arith.constant 0 : index
    %c0_5 = arith.constant 0 : index
    %10 = vector.load %arg4[%c0_4, %c0_5] : memref<1x8xf32, #tpu.memory_space<vmem>>, vector<1x8xf32>
    tpu.vector_store %arg4[%c0_4, %c0_5], %9 {strides = array<i32>} : memref<1x8xf32, #tpu.memory_space<vmem>>, vector<1x8xf32>,
    return
  }
  func.func @transform_0(%arg0: i32) -> (i32, i32) {
    %c0_i32 = arith.constant 0 : i32
    %c0_i32_0 = arith.constant 0 : i32
    return %arg0, %c0_i32 : i32, i32
  }
  func.func @transform_1(%arg0: i32) -> (i32, i32) {
    %c0_i32 = arith.constant 0 : i32
    %c0_i32_0 = arith.constant 0 : i32
    %c0_i32_1 = arith.constant 0 : i32
    return %c0_i32, %c0_i32_0 : i32, i32
  }
  func.func @transform_2(%arg0: i32) -> i32 {
    %c0_i32 = arith.constant 0 : i32
    %c0_i32_0 = arith.constant 0 : i32
    return %c0_i32 : i32
  }
  func.func @transform_3(%arg0: i32) -> (i32, i32) {
    %c0_i32 = arith.constant 0 : i32
    %c0_i32_0 = arith.constant 0 : i32
    return %c0_i32, %arg0 : i32, i32
  }
}

</mosaic_0001>

<llo_original>
// kernel: tpu_custom_call.1
$region0: #{tpu_custom_call.1}
  #allocation0 [shape = 'u32[]', space=smem, size = 0x4, offset = 0x4, fixed_abs, tag = 'smem constant byte address 0x4 - core index']
  #allocation1 [shape = 'u32[144,128]{1,0:T(1,128)}', space=vmem, size = 0x12000, scoped, tag = 'internal scratch']
  #allocation2 [shape = 'f32[1]{0:T(128)S(6)}', space=smem, size = 0x200, scoped, tag = 'scoped memory for tpu_custom_call.1']
  %s0 = inlined_call_operand.vmem [shape: f32[8,3], index: 0, kind: input, shape index: {}]
  %s1 = inlined_call_operand.vmem [shape: f32[1,3], index: 1, kind: input, shape index: {}]
  %s2 = inlined_call_operand.<no memory space> [shape: f32[1], index: 2, kind: input, shape index: {}]
  %s3 = inlined_call_operand.hbm [shape: f32[1,8], index: 3, kind: output, shape index: {}]
  %s4 = sld [smem:[#allocation0]]
  $region22: #{tpu_custom_call.1} parent=0
    _
  %s6 = ssub.s32 1, %s4
  %s7 = scalar_select 0, %s6, %s4
  %8 = sst [smem:[#allocation2]] %s2
  $region1: #{tpu_custom_call.1} parent=0
    #allocation3 [shape = 'u8[512]{0}', space=vmem, size = 0x400, scoped, tag = 'output window, operand 0, single buffered']
    #allocation4 [shape = 's32[1]{0}', space=sflag, size = 0x4, scoped, tag = 'scoped memory for tpu_custom_call.1']
    %9 = vsyncpa [#allocation4], 0
    // Predicated region
    $region2: #{tpu_custom_call.1} parent=1 // pred_check
      _
    $region3: #{tpu_custom_call.1} parent=1 // pred_check_branch
      %11 = sbr.rel (0) target = $region5
    $region4: #{tpu_custom_call.1} parent=1 // pred_region
      _
    $region5: #{tpu_custom_call.1} parent=1 // pred_fallthru
      _
    // Predicated region
    $region6: #{tpu_custom_call.1} parent=1 // pred_check
      _
    $region7: #{tpu_custom_call.1} parent=1 // pred_check_branch
      %13 = sbr.rel (0) target = $region9
    $region8: #{tpu_custom_call.1} parent=1 // pred_region
      _
    $region9: #{tpu_custom_call.1} parent=1 // pred_fallthru
      _
    // Predicated region
    $region10: #{tpu_custom_call.1} parent=1 // pred_check
      _
    $region11: #{tpu_custom_call.1} parent=1 // pred_check_branch
      %15 = sbr.rel (0) target = $region13
    $region12: #{tpu_custom_call.1} parent=1 // pred_region
      _
    $region13: #{tpu_custom_call.1} parent=1 // pred_fallthru
      _
    %v16 = vld [vmem:[%s0] sm:$0xff]
    %v17 = vld [vmem:[%s1] sm:$0x1]
    %v19 = vlaneseq
    %v20 = vshrl.u32 %v19, 7
    %v21 = vsub.s32 0, %v20
    %v22 = vrot.slane %v17, %v21
    %v24 = vmul.f32 %v16, %v22
    %vm25 = vcmask 23552
    %v26 = vsel %vm25, %v24, 0.0
    %27 = vadd.xlane.f32.xlu0 %v26
    %v28 = vpop.xlane.xlu0 %27
    %s29 = sld [smem:[#allocation2]]
    %v30 = vstv %s29
    %v31 = vadd.f32 %v28, %v30
    %32 = vxpose.xlu0.b32.start [1/16] %v31, 128
    %33 = vxpose.xlu0.b32.cont [2/16] 0.0, 128
    %34 = vxpose.xlu0.b32.cont [3/16] 0.0, 128
    %35 = vxpose.xlu0.b32.cont [4/16] 0.0, 128
    %36 = vxpose.xlu0.b32.cont [5/16] 0.0, 128
    %37 = vxpose.xlu0.b32.cont [6/16] 0.0, 128
    %38 = vxpose.xlu0.b32.cont [7/16] 0.0, 128
    %39 = vxpose.xlu0.b32.cont [8/16] 0.0, 128
    %40 = vxpose.xlu0.b32.cont [9/16] 0.0, 128
    %41 = vxpose.xlu0.b32.cont [10/16] 0.0, 128
    %42 = vxpose.xlu0.b32.cont [11/16] 0.0, 128
    %43 = vxpose.xlu0.b32.cont [12/16] 0.0, 128
    %44 = vxpose.xlu0.b32.cont [13/16] 0.0, 128
    %45 = vxpose.xlu0.b32.cont [14/16] 0.0, 128
    %46 = vxpose.xlu0.b32.cont [15/16] 0.0, 128
    %47 = vxpose.xlu0.b32.end [16/16] 0.0, 128
    %v48 = vpop.trf.xlu0
    %v49 = vpop.trf.xlu0
    %v50 = vpop.trf.xlu0
    %v51 = vpop.trf.xlu0
    %v52 = vpop.trf.xlu0
    %v53 = vpop.trf.xlu0
    %v54 = vpop.trf.xlu0
    %v55 = vpop.trf.xlu0
    %v56 = vpop.trf.xlu0
    %v57 = vpop.trf.xlu0
    %v58 = vpop.trf.xlu0
    %v59 = vpop.trf.xlu0
    %v60 = vpop.trf.xlu0
    %v61 = vpop.trf.xlu0
    %v62 = vpop.trf.xlu0
    %v63 = vpop.trf.xlu0
    %vm64 = vcmask 57344
    %65 = vst.msk [vmem:[#allocation3] sm:$0x1] %vm64, %v48
    // Predicated region
    $region14: #{tpu_custom_call.1} parent=1 // pred_check
      _
    $region15: #{tpu_custom_call.1} parent=1 // pred_check_branch
      %67 = sbr.rel (0) target = $region17
    $region16: #{tpu_custom_call.1} parent=1 // pred_region
      %s69 = ssub.s32 16, 16
      %70 = vsyncadd [#allocation4], %s69
      %s72 = sshll.u32 [#allocation3], 4
      %s73 = int_to_ptr.vmem [resolvable:$true] %s72
      %75 = dma.vmem_to_hbm [thread:$0]  %s73, 16, %s3, [#allocation4]
    $region17: #{tpu_custom_call.1} parent=1 // pred_fallthru
      _
    // Predicated region
    $region18: #{tpu_custom_call.1} parent=1 // pred_check
      _
    $region19: #{tpu_custom_call.1} parent=1 // pred_check_branch
      %77 = sbr.rel (0) target = $region21
    $region20: #{tpu_custom_call.1} parent=1 // pred_region
      %78 = dma.done [#allocation4], 16
    $region21: #{tpu_custom_call.1} parent=1 // pred_fallthru
      _
    %79 = vsyncpa [#allocation4], 1

</llo_original>
